<compile_context>
chip_gen: v7x
topology: tpu7x:2x2x1
jax: 0.10.0
libtpu: 0.0.40
codegen_flags: <defaults>
</compile_context>

<pallas_src>
import math
import functools

import jax
import jax.numpy as jnp
from jax import lax
from jax.experimental import pallas as pl
from jax.experimental.pallas import tpu as pltpu


def ultimus_kernel(x_ref, wqkv_ref, bqkv_ref, wfc_ref, bfc_ref, o_ref, *, d_k):
    x = x_ref[...]                                            # (B, in_nodes) f32

    # Fused Q/K/V projection: single MXU pass over (in_nodes, 3*d_k), one ReLU.
    qkv = jnp.maximum(
        jnp.dot(x, wqkv_ref[...], preferred_element_type=jnp.float32)
        + bqkv_ref[...], 0.0)                                 # (B, 3*d_k)
    q = qkv[:, 0 * d_k:1 * d_k]
    k = qkv[:, 1 * d_k:2 * d_k]
    v = qkv[:, 2 * d_k:3 * d_k]

    # SA = Q^T @ K : contract over the batch axis -> (d_k, d_k)
    sa = lax.dot_general(q, k, (((0,), (0,)), ((), ())),
                         preferred_element_type=jnp.float32)

    # softmax over dim 0 (normalize down each column).
    # The 1/sqrt(d_k) scale is pre-folded into wfc by the wrapper.
    sa_max = jnp.max(sa, axis=0, keepdims=True)
    e = jnp.exp(sa - sa_max)
    denom = jnp.sum(e, axis=0, keepdims=True)
    sa_soft = e * pl.reciprocal(denom, approx=True)           # EUP vrcp

    # ATT = V @ softmax(SA) : (B, d_k)
    att = jnp.dot(v, sa_soft, preferred_element_type=jnp.float32)

    # out = relu(ATT @ (wfc / sqrt(d_k)) + bfc) : (B, in_nodes)
    out = jnp.maximum(
        jnp.dot(att, wfc_ref[...], preferred_element_type=jnp.float32)
        + bfc_ref[...], 0.0)
    o_ref[...] = out.astype(o_ref.dtype)


def ultimus_forward(x, params):
    """x: (B, in_nodes) float32. params: dict of pre-transposed weights/biases."""
    B, in_nodes = x.shape
    d_k = params["wq"].shape[1]

    # Pack Q/K/V weights/biases into a single matmul operand; fold the
    # 1/sqrt(d_k) softmax scale into the fc1 weight (algebraically free).
    wqkv = jnp.concatenate([params["wq"], params["wk"], params["wv"]], axis=1)
    bqkv = jnp.concatenate([params["bq"], params["bk"], params["bv"]], axis=1)
    wfc_scaled = params["wfc"] * (1.0 / math.sqrt(d_k))
    bfc = params["bfc"]

    kernel = functools.partial(ultimus_kernel, d_k=d_k)
    vmem = pl.BlockSpec(memory_space=pltpu.VMEM)

    # Advisory cost estimate: this kernel is latency-bound at small shapes.
    flops = (2 * B * in_nodes * (3 * d_k)     # fused QKV projection
             + 2 * B * d_k * d_k              # SA = Q^T K
             + 2 * B * d_k * d_k              # ATT = V @ softmax(SA)
             + 2 * B * d_k * in_nodes)        # fc1
    operands = (x, wqkv, bqkv, wfc_scaled, bfc)
    bytes_accessed = sum(int(a.size) * a.dtype.itemsize for a in operands) \
        + B * in_nodes * 4

    # TODO(synk): if B ever scales to thousands of rows, switch to a two-phase
    # gridded kernel (batch-tiled SA accumulation, then batch-tiled ATT/FC) with
    # weights resident and bf16 matmul inputs on v6e/v7x.
    return pl.pallas_call(
        kernel,
        out_shape=jax.ShapeDtypeStruct((B, in_nodes), jnp.float32),
        in_specs=[vmem] * 5,
        out_specs=vmem,
        cost_estimate=pl.CostEstimate(
            flops=flops,
            transcendentals=d_k * d_k,
            bytes_accessed=bytes_accessed),
    )(*operands)


def init_params(key, in_nodes, d_k):
    """Deterministic init mirroring nn.Linear's uniform(-1/sqrt(fan_in), 1/sqrt(fan_in)).
    Weights stored transposed: (in_features, out_features)."""
    ks = jax.random.split(key, 8)

    def lin(kw, kb, fan_in, fan_out):
        bound = 1.0 / math.sqrt(fan_in)
        w = jax.random.uniform(kw, (fan_in, fan_out), jnp.float32, -bound, bound)
        b = jax.random.uniform(kb, (1, fan_out), jnp.float32, -bound, bound)
        return w, b

    wq, bq = lin(ks[0], ks[1], in_nodes, d_k)
    wk, bk = lin(ks[2], ks[3], in_nodes, d_k)
    wv, bv = lin(ks[4], ks[5], in_nodes, d_k)
    wfc, bfc = lin(ks[6], ks[7], d_k, in_nodes)
    return dict(wq=wq, bq=bq, wk=wk, bk=bk, wv=wv, bv=bv, wfc=wfc, bfc=bfc)


def ultimus_reference(x, params):
    """Pure-JAX reference matching the PyTorch forward exactly (unscaled params)."""
    d_k = params["wq"].shape[1]
    q = jax.nn.relu(x @ params["wq"] + params["bq"])
    v = jax.nn.relu(x @ params["wv"] + params["bv"])
    k = jax.nn.relu(x @ params["wk"] + params["bk"])
    sa = q.T @ k
    sa_soft = jax.nn.softmax(sa, axis=0) / math.sqrt(d_k)
    att = v @ sa_soft
    return jax.nn.relu(att @ params["wfc"] + params["bfc"])


if __name__ == "__main__":
    B, IN_NODES, D_K = 8, 32, 16

    key = jax.random.PRNGKey(0)
    kx, kp = jax.random.split(key)
    x = jax.random.normal(kx, (B, IN_NODES), dtype=jnp.float32)
    params = init_params(kp, IN_NODES, D_K)

    out = ultimus_forward(x, params)
    out = jax.block_until_ready(out)

    ref = ultimus_reference(x, params)
    assert out.shape == (B, IN_NODES)
    # Tolerance relaxed vs 1e-5 because of the EUP approximate reciprocal in the
    # softmax denominator (per perf review); still well within useful accuracy.
    assert jnp.allclose(out, ref, atol=5e-3, rtol=5e-3)

    print("KERNEL_OK")
</pallas_src>

<mosaic_0001>
module attributes {stable_mosaic.version = 11 : i64} {
  func.func @ultimus_kernel(%arg0: memref<8x32xf32, #tpu.memory_space<vmem>>, %arg1: memref<32x48xf32, #tpu.memory_space<vmem>>, %arg2: memref<1x48xf32, #tpu.memory_space<vmem>>, %arg3: memref<16x32xf32, #tpu.memory_space<vmem>>, %arg4: memref<1x32xf32, #tpu.memory_space<vmem>>, %arg5: memref<8x32xf32, #tpu.memory_space<vmem>>) attributes {dimension_semantics = [], scalar_prefetch = 0 : i64, scratch_operands = 0 : i64, tpu.core_type = #tpu.core_type<tc>} {
    %c0 = arith.constant 0 : index
    %c0_0 = arith.constant 0 : index
    %0 = vector.load %arg0[%c0, %c0_0] : memref<8x32xf32, #tpu.memory_space<vmem>>, vector<8x32xf32>
    %c0_1 = arith.constant 0 : index
    %c0_2 = arith.constant 0 : index
    %1 = vector.load %arg1[%c0_1, %c0_2] : memref<32x48xf32, #tpu.memory_space<vmem>>, vector<32x48xf32>
    %cst = arith.constant dense<0.000000e+00> : vector<8x48xf32>
    %2 = tpu.matmul %0, %1, %cst {dimension_numbers = #tpu.dot_dimension_numbers<[1], [0], [0], [1], [0, 0, 1, 1], [], []>} : vector<8x32xf32>, vector<32x48xf32>, vector<8x48xf32> -> vector<8x48xf32>
    %c0_3 = arith.constant 0 : index
    %c0_4 = arith.constant 0 : index
    %3 = vector.load %arg2[%c0_3, %c0_4] : memref<1x48xf32, #tpu.memory_space<vmem>>, vector<1x48xf32>
    %4 = vector.broadcast %3 : vector<1x48xf32> to vector<8x48xf32>
    %5 = arith.addf %2, %4 : vector<8x48xf32>
    %cst_5 = arith.constant 0.000000e+00 : f32
    %6 = vector.broadcast %cst_5 : f32 to vector<8x48xf32>
    %7 = arith.maximumf %5, %6 : vector<8x48xf32>
    %8 = vector.extract_strided_slice %7 {offsets = [0, 0], sizes = [8, 16], strides = [1, 1]} : vector<8x48xf32> to vector<8x16xf32>
    %9 = vector.extract_strided_slice %7 {offsets = [0, 16], sizes = [8, 16], strides = [1, 1]} : vector<8x48xf32> to vector<8x16xf32>
    %10 = vector.extract_strided_slice %7 {offsets = [0, 32], sizes = [8, 16], strides = [1, 1]} : vector<8x48xf32> to vector<8x16xf32>
    %cst_6 = arith.constant dense<0.000000e+00> : vector<16x16xf32>
    %11 = tpu.matmul %8, %9, %cst_6 {dimension_numbers = #tpu.dot_dimension_numbers<[0], [0], [1], [1], [0, 1, 1, 1], [], []>} : vector<8x16xf32>, vector<8x16xf32>, vector<16x16xf32> -> vector<16x16xf32>
    %cst_7 = arith.constant dense<0xFF800000> : vector<16xf32>
    %12 = vector.multi_reduction <maximumf>, %11, %cst_7 [0] : vector<16x16xf32> to vector<16xf32>
    %13 = vector.shape_cast %12 : vector<16xf32> to vector<1x16xf32>
    %14 = vector.broadcast %13 : vector<1x16xf32> to vector<16x16xf32>
    %15 = arith.subf %11, %14 : vector<16x16xf32>
    %16 = math.exp %15 : vector<16x16xf32>
    %cst_8 = arith.constant dense<0.000000e+00> : vector<16xf32>
    %17 = vector.multi_reduction <add>, %16, %cst_8 [0] : vector<16x16xf32> to vector<16xf32>
    %18 = vector.shape_cast %17 : vector<16xf32> to vector<1x16xf32>
    %19 = tpu.reciprocal %18 {approx = true} : vector<1x16xf32> -> vector<1x16xf32>
    %20 = vector.broadcast %19 : vector<1x16xf32> to vector<16x16xf32>
    %21 = arith.mulf %16, %20 : vector<16x16xf32>
    %cst_9 = arith.constant dense<0.000000e+00> : vector<8x16xf32>
    %22 = tpu.matmul %10, %21, %cst_9 {dimension_numbers = #tpu.dot_dimension_numbers<[1], [0], [0], [1], [0, 0, 1, 1], [], []>} : vector<8x16xf32>, vector<16x16xf32>, vector<8x16xf32> -> vector<8x16xf32>
    %c0_10 = arith.constant 0 : index
    %c0_11 = arith.constant 0 : index
    %23 = vector.load %arg3[%c0_10, %c0_11] : memref<16x32xf32, #tpu.memory_space<vmem>>, vector<16x32xf32>
    %cst_12 = arith.constant dense<0.000000e+00> : vector<8x32xf32>
    %24 = tpu.matmul %22, %23, %cst_12 {dimension_numbers = #tpu.dot_dimension_numbers<[1], [0], [0], [1], [0, 0, 1, 1], [], []>} : vector<8x16xf32>, vector<16x32xf32>, vector<8x32xf32> -> vector<8x32xf32>
    %c0_13 = arith.constant 0 : index
    %c0_14 = arith.constant 0 : index
    %25 = vector.load %arg4[%c0_13, %c0_14] : memref<1x32xf32, #tpu.memory_space<vmem>>, vector<1x32xf32>
    %26 = vector.broadcast %25 : vector<1x32xf32> to vector<8x32xf32>
    %27 = arith.addf %24, %26 : vector<8x32xf32>
    %cst_15 = arith.constant 0.000000e+00 : f32
    %28 = vector.broadcast %cst_15 : f32 to vector<8x32xf32>
    %29 = arith.maximumf %27, %28 : vector<8x32xf32>
    %c0_16 = arith.constant 0 : index
    %c0_17 = arith.constant 0 : index
    %30 = vector.load %arg5[%c0_16, %c0_17] : memref<8x32xf32, #tpu.memory_space<vmem>>, vector<8x32xf32>
    tpu.vector_store %arg5[%c0_16, %c0_17], %29 {strides = array<i32>} : memref<8x32xf32, #tpu.memory_space<vmem>>, vector<8x32xf32>,
    return
  }
}

</mosaic_0001>

<llo_original>
// kernel: tpu_custom_call.1
$region0: #{tpu_custom_call.1}
  #allocation0 [shape = 'u32[]', space=smem, size = 0x4, offset = 0x4, fixed_abs, tag = 'smem constant byte address 0x4 - core index']
  #allocation1 [shape = 'u32[144,128]{1,0:T(1,128)}', space=vmem, size = 0x12000, scoped, tag = 'internal scratch']
  %s0 = inlined_call_operand.hbm [shape: f32[8,32], index: 0, kind: input, shape index: {}]
  %s1 = inlined_call_operand.hbm [shape: f32[32,48], index: 1, kind: input, shape index: {}]
  %s2 = inlined_call_operand.vmem [shape: f32[1,48], index: 2, kind: input, shape index: {}]
  %s3 = inlined_call_operand.hbm [shape: f32[16,32], index: 3, kind: input, shape index: {}]
  %s4 = inlined_call_operand.vmem [shape: f32[1,32], index: 4, kind: input, shape index: {}]
  %s5 = inlined_call_operand.hbm [shape: f32[8,32], index: 5, kind: output, shape index: {}]
  %s6 = sld [smem:[#allocation0]]
  $region42: #{tpu_custom_call.1} parent=0
    _
  %s8 = ssub.s32 1, %s6
  %s9 = scalar_select 0, %s8, %s6
  $region1: #{tpu_custom_call.1} parent=0
    #allocation2 [shape = 'u8[4096]{0}', space=vmem, size = 0x1000, scoped, tag = 'input window, operand 0, single buffered']
    #allocation3 [shape = 's32[1]{0}', space=sflag, size = 0x4, scoped, tag = 'scoped memory for tpu_custom_call.1']
    #allocation4 [shape = 's32[1]{0}', space=sflag, size = 0x4, scoped, tag = 'scoped memory for tpu_custom_call.1']
    #allocation5 [shape = 'u8[16384]{0}', space=vmem, size = 0x4000, scoped, tag = 'input window, operand 1, single buffered']
    #allocation6 [shape = 's32[1]{0}', space=sflag, size = 0x4, scoped, tag = 'scoped memory for tpu_custom_call.1']
    #allocation7 [shape = 'u8[8192]{0}', space=vmem, size = 0x2000, scoped, tag = 'input window, operand 3, single buffered']
    #allocation8 [shape = 'u8[4096]{0}', space=vmem, size = 0x1000, scoped, tag = 'output window, operand 0, single buffered']
    %10 = vsyncpa [#allocation3], 0
    %11 = vsyncpa [#allocation6], 0
    %12 = vsyncpa [#allocation4], 0
    // Predicated region
    $region2: #{tpu_custom_call.1} parent=1 // pred_check
      _
    $region3: #{tpu_custom_call.1} parent=1 // pred_check_branch
      %14 = sbr.rel (0) target = $region5
    $region4: #{tpu_custom_call.1} parent=1 // pred_region
      %s16 = ssub.s32 128, 128
      %17 = vsyncadd [#allocation3], %s16
      %s19 = sshll.u32 [#allocation2], 4
      %s20 = int_to_ptr.vmem [resolvable:$true] %s19
      %22 = dma.hbm_to_vmem [thread:$0]  %s0, 128, %s20, [#allocation3]
    $region5: #{tpu_custom_call.1} parent=1 // pred_fallthru
      _
    // Predicated region
    $region6: #{tpu_custom_call.1} parent=1 // pred_check
      _
    $region7: #{tpu_custom_call.1} parent=1 // pred_check_branch
      %24 = sbr.rel (0) target = $region9
    $region8: #{tpu_custom_call.1} parent=1 // pred_region
      %s26 = ssub.s32 512, 512
      %27 = vsyncadd [#allocation6], %s26
      %s28 = sshll.u32 [#allocation5], 4
      %s29 = int_to_ptr.vmem [resolvable:$true] %s28
      %34 = dma.hbm_to_vmem [thread:$0]  %s1, 512, %s29, [#allocation6], 128, 128, 8
    $region9: #{tpu_custom_call.1} parent=1 // pred_fallthru
      _
    // Predicated region
    $region10: #{tpu_custom_call.1} parent=1 // pred_check
      _
    $region11: #{tpu_custom_call.1} parent=1 // pred_check_branch
      %36 = sbr.rel (0) target = $region13
    $region12: #{tpu_custom_call.1} parent=1 // pred_region
      _
    $region13: #{tpu_custom_call.1} parent=1 // pred_fallthru
      _
    // Predicated region
    $region14: #{tpu_custom_call.1} parent=1 // pred_check
      _
    $region15: #{tpu_custom_call.1} parent=1 // pred_check_branch
      %38 = sbr.rel (0) target = $region17
    $region16: #{tpu_custom_call.1} parent=1 // pred_region
      %s40 = ssub.s32 256, 256
      %41 = vsyncadd [#allocation6], %s40
      %s42 = sshll.u32 [#allocation7], 4
      %s43 = int_to_ptr.vmem [resolvable:$true] %s42
      %48 = dma.hbm_to_vmem [thread:$0]  %s3, 256, %s43, [#allocation6], 128, 128, 8
    $region17: #{tpu_custom_call.1} parent=1 // pred_fallthru
      _
    // Predicated region
    $region18: #{tpu_custom_call.1} parent=1 // pred_check
      _
    $region19: #{tpu_custom_call.1} parent=1 // pred_check_branch
      %50 = sbr.rel (0) target = $region21
    $region20: #{tpu_custom_call.1} parent=1 // pred_region
      _
    $region21: #{tpu_custom_call.1} parent=1 // pred_fallthru
      _
    // Predicated region
    $region22: #{tpu_custom_call.1} parent=1 // pred_check
      _
    $region23: #{tpu_custom_call.1} parent=1 // pred_check_branch
      %52 = sbr.rel (0) target = $region25
    $region24: #{tpu_custom_call.1} parent=1 // pred_region
      %53 = dma.done [#allocation3], 128
    $region25: #{tpu_custom_call.1} parent=1 // pred_fallthru
      _
    // Predicated region
    $region26: #{tpu_custom_call.1} parent=1 // pred_check
      _
    $region27: #{tpu_custom_call.1} parent=1 // pred_check_branch
      %55 = sbr.rel (0) target = $region29
    $region28: #{tpu_custom_call.1} parent=1 // pred_region
      %56 = dma.done [#allocation6], 512
    $region29: #{tpu_custom_call.1} parent=1 // pred_fallthru
      _
    // Predicated region
    $region30: #{tpu_custom_call.1} parent=1 // pred_check
      _
    $region31: #{tpu_custom_call.1} parent=1 // pred_check_branch
      %58 = sbr.rel (0) target = $region33
    $region32: #{tpu_custom_call.1} parent=1 // pred_region
      %59 = dma.done [#allocation6], 256
    $region33: #{tpu_custom_call.1} parent=1 // pred_fallthru
      _
    %v60 = vld [vmem:[#allocation2] sm:$0xff]
    %v61 = vld [vmem:[#allocation5] sm:$0xff]
    %v62 = vld [vmem:[#allocation5 + $0x8] sm:$0xff]
    %v63 = vld [vmem:[#allocation5 + $0x10] sm:$0xff]
    %v64 = vld [vmem:[#allocation5 + $0x18] sm:$0xff]
    %v65 = vld [vmem:[%s2] sm:$0x1]
    %v67 = vlaneseq
    %v68 = vshrl.u32 %v67, 7
    %v69 = vsub.s32 0, %v68
    %v70 = vrot.slane %v65, %v69
    %vm72 = vcmask 261120
    %v74 = vsel %vm72, %v60, 0
    %76 = vmatprep.subr.mxu0 0.0
    %77 = vmatpush1.msra.mxu0 %v61
    %78 = vmatprep.subr.mxu0 0.0
    %79 = vmatpush1.msra.mxu0 %v62
    %80 = vmatprep.subr.mxu0 0.0
    %81 = vmatpush1.msra.mxu0 %v63
    %82 = vmatprep.subr.mxu0 0.0
    %83 = vmatpush1.msra.mxu0 %v64
    %84 = vmatprep.subr.mxu0 0.0
    %85 = vmatpush1.msra.mxu0 0.0
    %86 = vmatprep.subr.mxu0 0.0
    %87 = vmatpush1.msra.mxu0 0.0
    %88 = vmatprep.subr.mxu0 0.0
    %89 = vmatpush1.msra.mxu0 0.0
    %90 = vmatprep.subr.mxu0 0.0
    %91 = vmatpush1.msra.mxu0 0.0
    %92 = vmatprep.subr.mxu0 0.0
    %93 = vmatpush1.msra.mxu0 0.0
    %94 = vmatprep.subr.mxu0 0.0
    %95 = vmatpush1.msra.mxu0 0.0
    %96 = vmatprep.subr.mxu0 0.0
    %97 = vmatpush1.msra.mxu0 0.0
    %98 = vmatprep.subr.mxu0 0.0
    %99 = vmatpush1.msra.mxu0 0.0
    %100 = vmatprep.subr.mxu0 0.0
    %101 = vmatpush1.msra.mxu0 0.0
    %102 = vmatprep.subr.mxu0 0.0
    %103 = vmatpush1.msra.mxu0 0.0
    %104 = vmatprep.subr.mxu0 0.0
    %105 = vmatpush1.msra.mxu0 0.0
    %106 = vmatprep.subr.mxu0 0.0
    %107 = vmatpush1.msra.mxu0 0.0
    %108 = vmatprep.subr.mxu0 0.0
    %109 = vmatpush1.msra.mxu0 0.0
    %110 = vmatprep.subr.mxu0 0.0
    %111 = vmatpush1.msra.mxu0 0.0
    %112 = vmatprep.subr.mxu0 0.0
    %113 = vmatpush1.msra.mxu0 0.0
    %114 = vmatprep.subr.mxu0 0.0
    %115 = vmatpush1.msra.mxu0 0.0
    %116 = vmatprep.subr.mxu0 0.0
    %117 = vmatpush1.msra.mxu0 0.0
    %118 = vmatprep.subr.mxu0 0.0
    %119 = vmatpush1.msra.mxu0 0.0
    %120 = vmatprep.subr.mxu0 0.0
    %121 = vmatpush1.msra.mxu0 0.0
    %122 = vmatprep.subr.mxu0 0.0
    %123 = vmatpush1.msra.mxu0 0.0
    %124 = vmatprep.subr.mxu0 0.0
    %125 = vmatpush1.msra.mxu0 0.0
    %126 = vmatprep.subr.mxu0 0.0
    %127 = vmatpush1.msra.mxu0 0.0
    %128 = vmatprep.subr.mxu0 0.0
    %129 = vmatpush1.msra.mxu0 0.0
    %130 = vmatprep.subr.mxu0 0.0
    %131 = vmatpush1.msra.mxu0 0.0
    %132 = vmatprep.subr.mxu0 0.0
    %133 = vmatpush1.msra.mxu0 0.0
    %134 = vmatprep.subr.mxu0 0.0
    %135 = vmatpush1.msra.mxu0 0.0
    %136 = vmatprep.subr.mxu0 0.0
    %137 = vmatpush1.msra.mxu0 0.0
    %138 = vmatprep.subr.mxu0 0.0
    %139 = vmatpush1.msra.mxu0 0.0
    %140 = vmatprep.mubr.f32.mxu0 0.0
    %141 = vmatmul.mubr.f32.gmra.mrb[0].mxu0 %v74
    %v142 = vpop.f32.mrb[0].mxu0
    %v143 = vadd.f32 %v70, %v142
    %v144 = vpop.f32.mrb[0].mxu0
    %145 = vdwg.mxu0
    %v146 = vmax.f32 %v143, 0.0
    %147 = vxpose.xlu0.b32.start [1/16] %v146, 128
    %148 = vxpose.xlu0.b32.cont [2/16] 0.0, 128
    %149 = vxpose.xlu0.b32.cont [3/16] 0.0, 128
    %150 = vxpose.xlu0.b32.cont [4/16] 0.0, 128
    %151 = vxpose.xlu0.b32.cont [5/16] 0.0, 128
    %152 = vxpose.xlu0.b32.cont [6/16] 0.0, 128
    %153 = vxpose.xlu0.b32.cont [7/16] 0.0, 128
    %154 = vxpose.xlu0.b32.cont [8/16] 0.0, 128
    %155 = vxpose.xlu0.b32.cont [9/16] 0.0, 128
    %156 = vxpose.xlu0.b32.cont [10/16] 0.0, 128
    %157 = vxpose.xlu0.b32.cont [11/16] 0.0, 128
    %158 = vxpose.xlu0.b32.cont [12/16] 0.0, 128
    %159 = vxpose.xlu0.b32.cont [13/16] 0.0, 128
    %160 = vxpose.xlu0.b32.cont [14/16] 0.0, 128
    %161 = vxpose.xlu0.b32.cont [15/16] 0.0, 128
    %162 = vxpose.xlu0.b32.end [16/16] 0.0, 128
    %v163 = vpop.trf.xlu0
    %v164 = vpop.trf.xlu0
    %v165 = vpop.trf.xlu0
    %v166 = vpop.trf.xlu0
    %v167 = vpop.trf.xlu0
    %v168 = vpop.trf.xlu0
    %v169 = vpop.trf.xlu0
    %v170 = vpop.trf.xlu0
    %v171 = vpop.trf.xlu0
    %v172 = vpop.trf.xlu0
    %v173 = vpop.trf.xlu0
    %v174 = vpop.trf.xlu0
    %v175 = vpop.trf.xlu0
    %v176 = vpop.trf.xlu0
    %v177 = vpop.trf.xlu0
    %v178 = vpop.trf.xlu0
    %180 = vrot.lane.b32.xlu0 %v146, 112
    %v181 = vpop.permute.xlu0 %180
    %vm183 = vcmask 64512
    %v185 = vsel %vm183, %v163, 0
    %v188 = vsel %vm183, %v164, 0
    %190 = vmatprep.subr.mxu0 0.0
    %191 = vmatpush1.msra.mxu0 %v181
    %192 = vmatprep.subr.mxu0 0.0
    %193 = vmatpush1.msra.mxu0 0.0
    %194 = vmatprep.subr.mxu0 0.0
    %195 = vmatpush1.msra.mxu0 0.0
    %196 = vmatprep.subr.mxu0 0.0
    %197 = vmatpush1.msra.mxu0 0.0
    %198 = vmatprep.subr.mxu0 0.0
    %199 = vmatpush1.msra.mxu0 0.0
    %200 = vmatprep.subr.mxu0 0.0
    %201 = vmatpush1.msra.mxu0 0.0
    %202 = vmatprep.subr.mxu0 0.0
    %203 = vmatpush1.msra.mxu0 0.0
    %204 = vmatprep.subr.mxu0 0.0
    %205 = vmatpush1.msra.mxu0 0.0
    %206 = vmatprep.subr.mxu0 0.0
    %207 = vmatpush1.msra.mxu0 0.0
    %208 = vmatprep.subr.mxu0 0.0
    %209 = vmatpush1.msra.mxu0 0.0
    %210 = vmatprep.subr.mxu0 0.0
    %211 = vmatpush1.msra.mxu0 0.0
    %212 = vmatprep.subr.mxu0 0.0
    %213 = vmatpush1.msra.mxu0 0.0
    %214 = vmatprep.subr.mxu0 0.0
    %215 = vmatpush1.msra.mxu0 0.0
    %216 = vmatprep.subr.mxu0 0.0
    %217 = vmatpush1.msra.mxu0 0.0
    %218 = vmatprep.subr.mxu0 0.0
    %219 = vmatpush1.msra.mxu0 0.0
    %220 = vmatprep.subr.mxu0 0.0
    %221 = vmatpush1.msra.mxu0 0.0
    %222 = vmatprep.subr.mxu0 0.0
    %223 = vmatpush1.msra.mxu0 0.0
    %224 = vmatprep.subr.mxu0 0.0
    %225 = vmatpush1.msra.mxu0 0.0
    %226 = vmatprep.subr.mxu0 0.0
    %227 = vmatpush1.msra.mxu0 0.0
    %228 = vmatprep.subr.mxu0 0.0
    %229 = vmatpush1.msra.mxu0 0.0
    %230 = vmatprep.subr.mxu0 0.0
    %231 = vmatpush1.msra.mxu0 0.0
    %232 = vmatprep.subr.mxu0 0.0
    %233 = vmatpush1.msra.mxu0 0.0
    %234 = vmatprep.subr.mxu0 0.0
    %235 = vmatpush1.msra.mxu0 0.0
    %236 = vmatprep.subr.mxu0 0.0
    %237 = vmatpush1.msra.mxu0 0.0
    %238 = vmatprep.subr.mxu0 0.0
    %239 = vmatpush1.msra.mxu0 0.0
    %240 = vmatprep.subr.mxu0 0.0
    %241 = vmatpush1.msra.mxu0 0.0
    %242 = vmatprep.subr.mxu0 0.0
    %243 = vmatpush1.msra.mxu0 0.0
    %244 = vmatprep.subr.mxu0 0.0
    %245 = vmatpush1.msra.mxu0 0.0
    %246 = vmatprep.subr.mxu0 0.0
    %247 = vmatpush1.msra.mxu0 0.0
    %248 = vmatprep.subr.mxu0 0.0
    %249 = vmatpush1.msra.mxu0 0.0
    %250 = vmatprep.subr.mxu0 0.0
    %251 = vmatpush1.msra.mxu0 0.0
    %252 = vmatprep.subr.mxu0 0.0
    %253 = vmatpush1.msra.mxu0 0.0
    %254 = vmatprep.mubr.f32.mxu0 0.0
    %255 = vmatmul.mubr.f32.gmra.mrb[0].mxu0 %v185
    %v256 = vpop.f32.mrb[0].mxu0
    %v257 = vadd.f32 0.0, %v256
    %v258 = vpop.f32.mrb[0].mxu0
    %259 = vmatprep.mubr.f32.mxu0 0.0
    %260 = vmatmul.mubr.f32.gmra.mrb[0].mxu0 %v188
    %v261 = vpop.f32.mrb[0].mxu0
    %v262 = vadd.f32 0.0, %v261
    %v263 = vpop.f32.mrb[0].mxu0
    %264 = vdwg.mxu0
    %vm265 = vcmask 130048
    %v266 = vsel %vm265, %v257, -inf
    %v267 = vsel %vm265, %v262, -inf
    %v268 = vmax.f32 %v266, %v267
    %v269 = vrot.slane %v268, 4
    %v270 = vmax.f32 %v268, %v269
    %v271 = vrot.slane %v270, 2
    %v272 = vmax.f32 %v270, %v271
    %v273 = vrot.slane %v272, 1
    %v274 = vmax.f32 %v272, %v273
    %v275 = vsub.f32 %v257, %v274
    %v276 = vsub.f32 %v262, %v274
    %v277 = vmul.f32 %v275, 1.442695
    %v278 = vpow.pop %v277
    %v279 = vmul.f32 %v276, 1.442695
    %v280 = vpow.pop %v279
    %v281 = vsel %vm265, %v278, 0.0
    %v282 = vsel %vm265, %v280, 0.0
    %v283 = vadd.f32 %v281, %v282
    %v284 = vrot.slane %v283, 4
    %v285 = vadd.f32 %v283, %v284
    %v286 = vrot.slane %v285, 2
    %v287 = vadd.f32 %v285, %v286
    %v288 = vrot.slane %v287, 1
    %v289 = vadd.f32 %v287, %v288
    %v290 = vrcp.pop %v289
    %v291 = vmul.f32 %v278, %v290
    %v292 = vmul.f32 %v280, %v290
    %293 = vrot.lane.b32.xlu0 %v146, 96
    %v294 = vpop.permute.xlu0 %293
    %v295 = vsel %vm265, %v294, 0
    %297 = vmatprep.subr.mxu0 0.0
    %298 = vmatpush1.msra.mxu0 %v291
    %299 = vmatprep.subr.mxu0 0.0
    %300 = vmatpush1.msra.mxu0 %v292
    %301 = vmatprep.subr.mxu0 0.0
    %302 = vmatpush1.msra.mxu0 0.0
    %303 = vmatprep.subr.mxu0 0.0
    %304 = vmatpush1.msra.mxu0 0.0
    %305 = vmatprep.subr.mxu0 0.0
    %306 = vmatpush1.msra.mxu0 0.0
    %307 = vmatprep.subr.mxu0 0.0
    %308 = vmatpush1.msra.mxu0 0.0
    %309 = vmatprep.subr.mxu0 0.0
    %310 = vmatpush1.msra.mxu0 0.0
    %311 = vmatprep.subr.mxu0 0.0
    %312 = vmatpush1.msra.mxu0 0.0
    %313 = vmatprep.subr.mxu0 0.0
    %314 = vmatpush1.msra.mxu0 0.0
    %315 = vmatprep.subr.mxu0 0.0
    %316 = vmatpush1.msra.mxu0 0.0
    %317 = vmatprep.subr.mxu0 0.0
    %318 = vmatpush1.msra.mxu0 0.0
    %319 = vmatprep.subr.mxu0 0.0
    %320 = vmatpush1.msra.mxu0 0.0
    %321 = vmatprep.subr.mxu0 0.0
    %322 = vmatpush1.msra.mxu0 0.0
    %323 = vmatprep.subr.mxu0 0.0
    %324 = vmatpush1.msra.mxu0 0.0
    %325 = vmatprep.subr.mxu0 0.0
    %326 = vmatpush1.msra.mxu0 0.0
    %327 = vmatprep.subr.mxu0 0.0
    %328 = vmatpush1.msra.mxu0 0.0
    %329 = vmatprep.subr.mxu0 0.0
    %330 = vmatpush1.msra.mxu0 0.0
    %331 = vmatprep.subr.mxu0 0.0
    %332 = vmatpush1.msra.mxu0 0.0
    %333 = vmatprep.subr.mxu0 0.0
    %334 = vmatpush1.msra.mxu0 0.0
    %335 = vmatprep.subr.mxu0 0.0
    %336 = vmatpush1.msra.mxu0 0.0
    %337 = vmatprep.subr.mxu0 0.0
    %338 = vmatpush1.msra.mxu0 0.0
    %339 = vmatprep.subr.mxu0 0.0
    %340 = vmatpush1.msra.mxu0 0.0
    %341 = vmatprep.subr.mxu0 0.0
    %342 = vmatpush1.msra.mxu0 0.0
    %343 = vmatprep.subr.mxu0 0.0
    %344 = vmatpush1.msra.mxu0 0.0
    %345 = vmatprep.subr.mxu0 0.0
    %346 = vmatpush1.msra.mxu0 0.0
    %347 = vmatprep.subr.mxu0 0.0
    %348 = vmatpush1.msra.mxu0 0.0
    %349 = vmatprep.subr.mxu0 0.0
    %350 = vmatpush1.msra.mxu0 0.0
    %351 = vmatprep.subr.mxu0 0.0
    %352 = vmatpush1.msra.mxu0 0.0
    %353 = vmatprep.subr.mxu0 0.0
    %354 = vmatpush1.msra.mxu0 0.0
    %355 = vmatprep.subr.mxu0 0.0
    %356 = vmatpush1.msra.mxu0 0.0
    %357 = vmatprep.subr.mxu0 0.0
    %358 = vmatpush1.msra.mxu0 0.0
    %359 = vmatprep.subr.mxu0 0.0
    %360 = vmatpush1.msra.mxu0 0.0
    %361 = vmatprep.mubr.f32.mxu0 0.0
    %362 = vmatmul.mubr.f32.gmra.mrb[0].mxu0 %v295
    %v363 = vpop.f32.mrb[0].mxu0
    %v364 = vadd.f32 0.0, %v363
    %v365 = vpop.f32.mrb[0].mxu0
    %366 = vdwg.mxu0
    %v367 = vld [vmem:[#allocation7] sm:$0xff]
    %v368 = vld [vmem:[#allocation7 + $0x8] sm:$0xff]
    %v369 = vld [vmem:[%s4] sm:$0x1]
    %v371 = vlaneseq
    %v372 = vshrl.u32 %v371, 7
    %v373 = vsub.s32 0, %v372
    %v374 = vrot.slane %v369, %v373
    %v377 = vsel %vm265, %v364, 0
    %379 = vmatprep.subr.mxu0 0.0
    %380 = vmatpush1.msra.mxu0 %v367
    %381 = vmatprep.subr.mxu0 0.0
    %382 = vmatpush1.msra.mxu0 %v368
    %383 = vmatprep.subr.mxu0 0.0
    %384 = vmatpush1.msra.mxu0 0.0
    %385 = vmatprep.subr.mxu0 0.0
    %386 = vmatpush1.msra.mxu0 0.0
    %387 = vmatprep.subr.mxu0 0.0
    %388 = vmatpush1.msra.mxu0 0.0
    %389 = vmatprep.subr.mxu0 0.0
    %390 = vmatpush1.msra.mxu0 0.0
    %391 = vmatprep.subr.mxu0 0.0
    %392 = vmatpush1.msra.mxu0 0.0
    %393 = vmatprep.subr.mxu0 0.0
    %394 = vmatpush1.msra.mxu0 0.0
    %395 = vmatprep.subr.mxu0 0.0
    %396 = vmatpush1.msra.mxu0 0.0
    %397 = vmatprep.subr.mxu0 0.0
    %398 = vmatpush1.msra.mxu0 0.0
    %399 = vmatprep.subr.mxu0 0.0
    %400 = vmatpush1.msra.mxu0 0.0
    %401 = vmatprep.subr.mxu0 0.0
    %402 = vmatpush1.msra.mxu0 0.0
    %403 = vmatprep.subr.mxu0 0.0
    %404 = vmatpush1.msra.mxu0 0.0
    %405 = vmatprep.subr.mxu0 0.0
    %406 = vmatpush1.msra.mxu0 0.0
    %407 = vmatprep.subr.mxu0 0.0
    %408 = vmatpush1.msra.mxu0 0.0
    %409 = vmatprep.subr.mxu0 0.0
    %410 = vmatpush1.msra.mxu0 0.0
    %411 = vmatprep.subr.mxu0 0.0
    %412 = vmatpush1.msra.mxu0 0.0
    %413 = vmatprep.subr.mxu0 0.0
    %414 = vmatpush1.msra.mxu0 0.0
    %415 = vmatprep.subr.mxu0 0.0
    %416 = vmatpush1.msra.mxu0 0.0
    %417 = vmatprep.subr.mxu0 0.0
    %418 = vmatpush1.msra.mxu0 0.0
    %419 = vmatprep.subr.mxu0 0.0
    %420 = vmatpush1.msra.mxu0 0.0
    %421 = vmatprep.subr.mxu0 0.0
    %422 = vmatpush1.msra.mxu0 0.0
    %423 = vmatprep.subr.mxu0 0.0
    %424 = vmatpush1.msra.mxu0 0.0
    %425 = vmatprep.subr.mxu0 0.0
    %426 = vmatpush1.msra.mxu0 0.0
    %427 = vmatprep.subr.mxu0 0.0
    %428 = vmatpush1.msra.mxu0 0.0
    %429 = vmatprep.subr.mxu0 0.0
    %430 = vmatpush1.msra.mxu0 0.0
    %431 = vmatprep.subr.mxu0 0.0
    %432 = vmatpush1.msra.mxu0 0.0
    %433 = vmatprep.subr.mxu0 0.0
    %434 = vmatpush1.msra.mxu0 0.0
    %435 = vmatprep.subr.mxu0 0.0
    %436 = vmatpush1.msra.mxu0 0.0
    %437 = vmatprep.subr.mxu0 0.0
    %438 = vmatpush1.msra.mxu0 0.0
    %439 = vmatprep.subr.mxu0 0.0
    %440 = vmatpush1.msra.mxu0 0.0
    %441 = vmatprep.subr.mxu0 0.0
    %442 = vmatpush1.msra.mxu0 0.0
    %443 = vmatprep.mubr.f32.mxu0 0.0
    %444 = vmatmul.mubr.f32.gmra.mrb[0].mxu0 %v377
    %v445 = vpop.f32.mrb[0].mxu0
    %v446 = vadd.f32 %v374, %v445
    %v447 = vpop.f32.mrb[0].mxu0
    %448 = vdwg.mxu0
    %v449 = vmax.f32 %v446, 0.0
    %450 = vst.msk [vmem:[#allocation8] sm:$0xff] %vm72, %v449
    // Predicated region
    $region34: #{tpu_custom_call.1} parent=1 // pred_check
      _
    $region35: #{tpu_custom_call.1} parent=1 // pred_check_branch
      %452 = sbr.rel (0) target = $region37
    $region36: #{tpu_custom_call.1} parent=1 // pred_region
      %s454 = ssub.s32 128, 128
      %455 = vsyncadd [#allocation4], %s454
      %s457 = sshll.u32 [#allocation8], 4
      %s458 = int_to_ptr.vmem [resolvable:$true] %s457
      %460 = dma.vmem_to_hbm [thread:$0]  %s458, 128, %s5, [#allocation4]
    $region37: #{tpu_custom_call.1} parent=1 // pred_fallthru
      _
    // Predicated region
    $region38: #{tpu_custom_call.1} parent=1 // pred_check
      _
    $region39: #{tpu_custom_call.1} parent=1 // pred_check_branch
      %462 = sbr.rel (0) target = $region41
    $region40: #{tpu_custom_call.1} parent=1 // pred_region
      %463 = dma.done [#allocation4], 128
    $region41: #{tpu_custom_call.1} parent=1 // pred_fallthru
      _
    %464 = vsyncpa [#allocation3], 1
    %465 = vsyncpa [#allocation6], 1
    %466 = vsyncpa [#allocation4], 1

</llo_original>
